<compile_context>
chip_gen: v7x
topology: tpu7x:2x2x1
jax: 0.10.0
libtpu: 0.0.40
codegen_flags: <defaults>
</compile_context>

<pallas_src>
import math

import jax
import jax.numpy as jnp
from jax import lax
from jax.experimental import pallas as pl
from jax.experimental.pallas import tpu as pltpu


def syllable_emb_kernel(ids_ref, tab_ref, out_ref):
    # ids_ref: (rows, pack)        int32 syllable class ids, `pack` tokens / row
    # tab_ref: (pack*C, pack*O)    block-diagonal fused table (VMEM resident)
    # out_ref: (rows, pack*O)      lane-packed output; row-major == (rows*pack, O)
    ids = ids_ref[...]                                  # (rows, pack)
    rows, pack = ids.shape
    cb = tab_ref.shape[0]                               # pack * C
    c = cb // pack

    # Packed one-hot: lane j in [p*C, (p+1)*C) is 1 iff token p of this row has
    # class j - p*C.  Code ranges are disjoint across p, so a sum of `pack`
    # broadcast compares builds the whole thing on the VPU (compute is a
    # non-factor here -- the kernel is DMA/overhead-bound).
    lane = lax.broadcasted_iota(jnp.int32, (rows, cb), 1)
    onehot = (lane == ids[:, 0:1]).astype(jnp.float32)          # p = 0
    for p in range(1, pack):
        code = ids[:, p:p + 1] + p * c                          # (rows, 1)
        onehot = onehot + (lane == code).astype(jnp.float32)

    # Single fused MXU op: embedding gather + Linear(E, O) projection for all
    # `pack` tokens of every row at once, already in the packed output layout.
    out = jnp.dot(onehot, tab_ref[...], preferred_element_type=jnp.float32)
    out_ref[...] = out.astype(out_ref.dtype)


def syllable_embedding_forward(input_ids, word2syllable, emb_table, proj_w,
                               *, tm=16384, out_dtype=jnp.float32):
    """input_ids: (B, T) int32 word ids.
    word2syllable: (V,) int32 mapping word id -> syllable class.
    emb_table: (C, E) float32 embedding weight.
    proj_w: (O, E) float32 (PyTorch nn.Linear weight layout, no bias).
    Returns (B, T, O) `out_dtype`."""
    B, T = input_ids.shape
    N = B * T
    C, _E = emb_table.shape
    O = proj_w.shape[0]

    # --- glue (plain JAX): word -> syllable remap, clamp, flatten -------------
    # TODO(synk): folding this remap into the kernel (one-hot over raw word ids
    # against fused[:, word2syllable]) would save ~8 B/token of HBM traffic, but
    # only pays when the vocabulary is small enough for a (V,)-wide one-hot.
    syl = jnp.take(word2syllable, input_ids.reshape(-1), axis=0).astype(jnp.int32)
    syl = jnp.clip(syl, 0, C - 1)   # PyTorch would raise on OOB ids; we clamp.

    # --- lane packing factor ---------------------------------------------------
    # Pack `pack` tokens per output row so pack*O is a multiple of 128 whenever
    # feasible: full unmasked 128-lane stores on every generation (v5e has a
    # single vector-store slot, so masked narrow stores hurt most there).
    pack = math.lcm(O, 128) // O
    if pack * pack * C * O * 4 > (4 << 20):   # keep block-diag table VMEM-resident
        pack = 1                              # still correct; partially masked stores

    # --- tile size -------------------------------------------------------------
    step = 8 * pack                                    # token-axis granularity
    tm = max(step, (tm // step) * step)
    tm = min(tm, ((N + step - 1) // step) * step)      # don't pad tiny inputs up
    balance_cap = ((N // 4) // step) * step            # >= 4 grid steps when the
    if balance_cap >= step:                            # input is big enough (v7x
        tm = min(tm, balance_cap)                      # has 2 TCs on this axis)
    n_blocks = pl.cdiv(N, tm)
    N_pad = n_blocks * tm
    rows_per_block = tm // pack

    ids2d = (jnp.zeros((N_pad,), jnp.int32).at[:N].set(syl)
             .reshape(N_pad // pack, pack))

    # --- fused + block-diagonal table ------------------------------------------
    # emb[ids] @ W.T == onehot @ (emb @ W.T); expand (C, O) block-diagonally so a
    # single matmul emits `pack` tokens per lane-dense output row.
    fused = jnp.dot(emb_table, proj_w.T, preferred_element_type=jnp.float32)  # (C, O)
    eye = jnp.eye(pack, dtype=fused.dtype)
    bigtab = jnp.einsum('pq,co->pcqo', eye, fused).reshape(pack * C, pack * O)

    out_packed = pl.pallas_call(
        syllable_emb_kernel,
        out_shape=jax.ShapeDtypeStruct((N_pad // pack, pack * O), out_dtype),
        grid_spec=pltpu.PrefetchScalarGridSpec(
            num_scalar_prefetch=0,
            grid=(n_blocks,),
            in_specs=[
                pl.BlockSpec((rows_per_block, pack), lambda i: (i, 0)),   # ids
                pl.BlockSpec((pack * C, pack * O), lambda i: (0, 0)),     # table (resident)
            ],
            out_specs=pl.BlockSpec((rows_per_block, pack * O), lambda i: (i, 0)),
        ),
        compiler_params=pltpu.CompilerParams(
            dimension_semantics=("parallel",)),
    )(ids2d, bigtab)

    # (N_pad//pack, pack*O) has the same row-major bytes as (N_pad, O): the
    # reshape below is free -- no transpose, no extra HBM round trip.
    return out_packed.reshape(N_pad, O)[:N].reshape(B, T, O)


if __name__ == "__main__":
    key = jax.random.PRNGKey(0)
    k_w2s, k_emb, k_proj, k_inp = jax.random.split(key, 4)

    # Small, module-consistent shapes.
    V = 50            # vocabulary size (len(word2syllable))
    C = 8             # num syllable classes = max(word2syllable) + 1
    E = 32            # embedding_dim
    O = 16            # output_dim (!= E -> Linear out_proj, no bias)
    B, T = 2, 8       # batch, sequence

    # word2syllable buffer: random classes, force max to C-1 so num_classes == C.
    word2syllable = jax.random.randint(k_w2s, (V,), 0, C, dtype=jnp.int32)
    word2syllable = word2syllable.at[0].set(C - 1)

    # Embedding weight: initialize_embedding(..., 'uniform1') -> U(-0.1, 0.1).
    emb_table = jax.random.uniform(k_emb, (C, E), jnp.float32,
                                   minval=-0.1, maxval=0.1)

    # out_proj weight: xavier_uniform fan-in style init (deterministic, synthetic).
    fan_in = E
    bound = math.sqrt(3.0 / fan_in)
    proj_w = jax.random.uniform(k_proj, (O, E), jnp.float32,
                                minval=-bound, maxval=bound)

    # Input word ids.
    input_ids = jax.random.randint(k_inp, (B, T), 0, V, dtype=jnp.int32)

    out = syllable_embedding_forward(input_ids, word2syllable, emb_table, proj_w)
    out = jax.block_until_ready(out)

    # Pure-JAX reference for sanity.
    syl = jnp.take(word2syllable, input_ids, axis=0)
    ref = jnp.take(emb_table, syl, axis=0) @ proj_w.T
    assert out.shape == (B, T, O)
    assert jnp.allclose(out, ref, atol=1e-5, rtol=1e-5)

    print("KERNEL_OK")
</pallas_src>

<mosaic_0001>
module attributes {stable_mosaic.version = 11 : i64} {
  func.func @syllable_emb_kernel(%arg0: i32, %arg1: memref<8x8xi32, #tpu.memory_space<vmem>>, %arg2: memref<64x128xf32, #tpu.memory_space<vmem>>, %arg3: memref<8x128xf32, #tpu.memory_space<vmem>>) attributes {dimension_semantics = [#tpu.dimension_semantics<parallel>], iteration_bounds = array<i64: 1>, scalar_prefetch = 0 : i64, scratch_operands = 0 : i64, tpu.core_type = #tpu.core_type<tc>, window_params = [{transform_indices = @transform_0, window_bounds = array<i64: 8, 8>}, {pipeline_mode = #tpu.pipeline_mode<synchronous>, transform_indices = @transform_1, window_bounds = array<i64: 64, 128>}, {transform_indices = @transform_2, window_bounds = array<i64: 8, 128>}]} {
    %c0 = arith.constant 0 : index
    %c0_0 = arith.constant 0 : index
    %0 = vector.load %arg1[%c0, %c0_0] : memref<8x8xi32, #tpu.memory_space<vmem>>, vector<8x8xi32>
    %1 = tpu.iota {dimensions = array<i32: 1>} : vector<8x64xi32>
    %2 = vector.extract_strided_slice %0 {offsets = [0, 0], sizes = [8, 1], strides = [1, 1]} : vector<8x8xi32> to vector<8x1xi32>
    %3 = vector.broadcast %2 : vector<8x1xi32> to vector<8x64xi32>
    %4 = arith.cmpi eq, %1, %3 : vector<8x64xi32>
    %5 = arith.extui %4 : vector<8x64xi1> to vector<8x64xi32>
    %6 = arith.sitofp %5 : vector<8x64xi32> to vector<8x64xf32>
    %7 = vector.extract_strided_slice %0 {offsets = [0, 1], sizes = [8, 1], strides = [1, 1]} : vector<8x8xi32> to vector<8x1xi32>
    %c8_i32 = arith.constant 8 : i32
    %8 = vector.broadcast %c8_i32 : i32 to vector<8x1xi32>
    %9 = arith.addi %7, %8 : vector<8x1xi32>
    %10 = vector.broadcast %9 : vector<8x1xi32> to vector<8x64xi32>
    %11 = arith.cmpi eq, %1, %10 : vector<8x64xi32>
    %12 = arith.extui %11 : vector<8x64xi1> to vector<8x64xi32>
    %13 = arith.sitofp %12 : vector<8x64xi32> to vector<8x64xf32>
    %14 = arith.addf %6, %13 : vector<8x64xf32>
    %15 = vector.extract_strided_slice %0 {offsets = [0, 2], sizes = [8, 1], strides = [1, 1]} : vector<8x8xi32> to vector<8x1xi32>
    %c16_i32 = arith.constant 16 : i32
    %16 = vector.broadcast %c16_i32 : i32 to vector<8x1xi32>
    %17 = arith.addi %15, %16 : vector<8x1xi32>
    %18 = vector.broadcast %17 : vector<8x1xi32> to vector<8x64xi32>
    %19 = arith.cmpi eq, %1, %18 : vector<8x64xi32>
    %20 = arith.extui %19 : vector<8x64xi1> to vector<8x64xi32>
    %21 = arith.sitofp %20 : vector<8x64xi32> to vector<8x64xf32>
    %22 = arith.addf %14, %21 : vector<8x64xf32>
    %23 = vector.extract_strided_slice %0 {offsets = [0, 3], sizes = [8, 1], strides = [1, 1]} : vector<8x8xi32> to vector<8x1xi32>
    %c24_i32 = arith.constant 24 : i32
    %24 = vector.broadcast %c24_i32 : i32 to vector<8x1xi32>
    %25 = arith.addi %23, %24 : vector<8x1xi32>
    %26 = vector.broadcast %25 : vector<8x1xi32> to vector<8x64xi32>
    %27 = arith.cmpi eq, %1, %26 : vector<8x64xi32>
    %28 = arith.extui %27 : vector<8x64xi1> to vector<8x64xi32>
    %29 = arith.sitofp %28 : vector<8x64xi32> to vector<8x64xf32>
    %30 = arith.addf %22, %29 : vector<8x64xf32>
    %31 = vector.extract_strided_slice %0 {offsets = [0, 4], sizes = [8, 1], strides = [1, 1]} : vector<8x8xi32> to vector<8x1xi32>
    %c32_i32 = arith.constant 32 : i32
    %32 = vector.broadcast %c32_i32 : i32 to vector<8x1xi32>
    %33 = arith.addi %31, %32 : vector<8x1xi32>
    %34 = vector.broadcast %33 : vector<8x1xi32> to vector<8x64xi32>
    %35 = arith.cmpi eq, %1, %34 : vector<8x64xi32>
    %36 = arith.extui %35 : vector<8x64xi1> to vector<8x64xi32>
    %37 = arith.sitofp %36 : vector<8x64xi32> to vector<8x64xf32>
    %38 = arith.addf %30, %37 : vector<8x64xf32>
    %39 = vector.extract_strided_slice %0 {offsets = [0, 5], sizes = [8, 1], strides = [1, 1]} : vector<8x8xi32> to vector<8x1xi32>
    %c40_i32 = arith.constant 40 : i32
    %40 = vector.broadcast %c40_i32 : i32 to vector<8x1xi32>
    %41 = arith.addi %39, %40 : vector<8x1xi32>
    %42 = vector.broadcast %41 : vector<8x1xi32> to vector<8x64xi32>
    %43 = arith.cmpi eq, %1, %42 : vector<8x64xi32>
    %44 = arith.extui %43 : vector<8x64xi1> to vector<8x64xi32>
    %45 = arith.sitofp %44 : vector<8x64xi32> to vector<8x64xf32>
    %46 = arith.addf %38, %45 : vector<8x64xf32>
    %47 = vector.extract_strided_slice %0 {offsets = [0, 6], sizes = [8, 1], strides = [1, 1]} : vector<8x8xi32> to vector<8x1xi32>
    %c48_i32 = arith.constant 48 : i32
    %48 = vector.broadcast %c48_i32 : i32 to vector<8x1xi32>
    %49 = arith.addi %47, %48 : vector<8x1xi32>
    %50 = vector.broadcast %49 : vector<8x1xi32> to vector<8x64xi32>
    %51 = arith.cmpi eq, %1, %50 : vector<8x64xi32>
    %52 = arith.extui %51 : vector<8x64xi1> to vector<8x64xi32>
    %53 = arith.sitofp %52 : vector<8x64xi32> to vector<8x64xf32>
    %54 = arith.addf %46, %53 : vector<8x64xf32>
    %55 = vector.extract_strided_slice %0 {offsets = [0, 7], sizes = [8, 1], strides = [1, 1]} : vector<8x8xi32> to vector<8x1xi32>
    %c56_i32 = arith.constant 56 : i32
    %56 = vector.broadcast %c56_i32 : i32 to vector<8x1xi32>
    %57 = arith.addi %55, %56 : vector<8x1xi32>
    %58 = vector.broadcast %57 : vector<8x1xi32> to vector<8x64xi32>
    %59 = arith.cmpi eq, %1, %58 : vector<8x64xi32>
    %60 = arith.extui %59 : vector<8x64xi1> to vector<8x64xi32>
    %61 = arith.sitofp %60 : vector<8x64xi32> to vector<8x64xf32>
    %62 = arith.addf %54, %61 : vector<8x64xf32>
    %c0_1 = arith.constant 0 : index
    %c0_2 = arith.constant 0 : index
    %63 = vector.load %arg2[%c0_1, %c0_2] : memref<64x128xf32, #tpu.memory_space<vmem>>, vector<64x128xf32>
    %cst = arith.constant dense<0.000000e+00> : vector<8x128xf32>
    %64 = tpu.matmul %62, %63, %cst {dimension_numbers = #tpu.dot_dimension_numbers<[1], [0], [0], [1], [0, 0, 1, 1], [], []>} : vector<8x64xf32>, vector<64x128xf32>, vector<8x128xf32> -> vector<8x128xf32>
    %c0_3 = arith.constant 0 : index
    %c0_4 = arith.constant 0 : index
    %65 = vector.load %arg3[%c0_3, %c0_4] : memref<8x128xf32, #tpu.memory_space<vmem>>, vector<8x128xf32>
    tpu.vector_store %arg3[%c0_3, %c0_4], %64 {strides = array<i32>} : memref<8x128xf32, #tpu.memory_space<vmem>>, vector<8x128xf32>,
    return
  }
  func.func @transform_0(%arg0: i32) -> (i32, i32) {
    %c0_i32 = arith.constant 0 : i32
    %c0_i32_0 = arith.constant 0 : i32
    return %arg0, %c0_i32 : i32, i32
  }
  func.func @transform_1(%arg0: i32) -> (i32, i32) {
    %c0_i32 = arith.constant 0 : i32
    %c0_i32_0 = arith.constant 0 : i32
    %c0_i32_1 = arith.constant 0 : i32
    return %c0_i32, %c0_i32_0 : i32, i32
  }
  func.func @transform_2(%arg0: i32) -> (i32, i32) {
    %c0_i32 = arith.constant 0 : i32
    %c0_i32_0 = arith.constant 0 : i32
    return %arg0, %c0_i32 : i32, i32
  }
}

</mosaic_0001>

<llo_original>
// kernel: tpu_custom_call.1
$region0: #{tpu_custom_call.1}
  #allocation0 [shape = 'u32[]', space=smem, size = 0x4, offset = 0x4, fixed_abs, tag = 'smem constant byte address 0x4 - core index']
  #allocation1 [shape = 'u32[144,128]{1,0:T(1,128)}', space=vmem, size = 0x12000, scoped, tag = 'internal scratch']
  %s0 = inlined_call_operand.hbm [shape: s32[8,8], index: 0, kind: input, shape index: {}]
  %s1 = inlined_call_operand.hbm [shape: f32[64,128], index: 1, kind: input, shape index: {}]
  %s2 = inlined_call_operand.hbm [shape: f32[8,128], index: 2, kind: output, shape index: {}]
  %s3 = sld [smem:[#allocation0]]
  $region26: #{tpu_custom_call.1} parent=0
    _
  %s5 = ssub.s32 1, %s3
  %s6 = scalar_select 0, %s5, %s3
  $region1: #{tpu_custom_call.1} parent=0
    #allocation2 [shape = 'u8[4096]{0}', space=vmem, size = 0x1000, scoped, tag = 'input window, operand 0, single buffered']
    #allocation3 [shape = 's32[1]{0}', space=sflag, size = 0x4, scoped, tag = 'scoped memory for tpu_custom_call.1']
    #allocation4 [shape = 's32[1]{0}', space=sflag, size = 0x4, scoped, tag = 'scoped memory for tpu_custom_call.1']
    #allocation5 [shape = 'u8[32768]{0}', space=vmem, size = 0x8000, scoped, tag = 'input window, operand 1, single buffered']
    #allocation6 [shape = 's32[1]{0}', space=sflag, size = 0x4, scoped, tag = 'scoped memory for tpu_custom_call.1']
    #allocation7 [shape = 'u8[4096]{0}', space=vmem, size = 0x1000, scoped, tag = 'output window, operand 0, single buffered']
    %7 = vsyncpa [#allocation3], 0
    %8 = vsyncpa [#allocation6], 0
    %9 = vsyncpa [#allocation4], 0
    // Predicated region
    $region2: #{tpu_custom_call.1} parent=1 // pred_check
      _
    $region3: #{tpu_custom_call.1} parent=1 // pred_check_branch
      %11 = sbr.rel (0) target = $region5
    $region4: #{tpu_custom_call.1} parent=1 // pred_region
      %s13 = ssub.s32 128, 128
      %14 = vsyncadd [#allocation3], %s13
      %s16 = sshll.u32 [#allocation2], 4
      %s17 = int_to_ptr.vmem [resolvable:$true] %s16
      %19 = dma.hbm_to_vmem [thread:$0]  %s0, 128, %s17, [#allocation3]
    $region5: #{tpu_custom_call.1} parent=1 // pred_fallthru
      _
    // Predicated region
    $region6: #{tpu_custom_call.1} parent=1 // pred_check
      _
    $region7: #{tpu_custom_call.1} parent=1 // pred_check_branch
      %21 = sbr.rel (0) target = $region9
    $region8: #{tpu_custom_call.1} parent=1 // pred_region
      %s23 = ssub.s32 1024, 1024
      %24 = vsyncadd [#allocation6], %s23
      %s25 = sshll.u32 [#allocation5], 4
      %s26 = int_to_ptr.vmem [resolvable:$true] %s25
      %31 = dma.hbm_to_vmem [thread:$0]  %s1, 1024, %s26, [#allocation6], 128, 128, 8
    $region9: #{tpu_custom_call.1} parent=1 // pred_fallthru
      _
    // Predicated region
    $region10: #{tpu_custom_call.1} parent=1 // pred_check
      _
    $region11: #{tpu_custom_call.1} parent=1 // pred_check_branch
      %33 = sbr.rel (0) target = $region13
    $region12: #{tpu_custom_call.1} parent=1 // pred_region
      %34 = dma.done [#allocation3], 128
    $region13: #{tpu_custom_call.1} parent=1 // pred_fallthru
      _
    // Predicated region
    $region14: #{tpu_custom_call.1} parent=1 // pred_check
      _
    $region15: #{tpu_custom_call.1} parent=1 // pred_check_branch
      %36 = sbr.rel (0) target = $region17
    $region16: #{tpu_custom_call.1} parent=1 // pred_region
      %37 = dma.done [#allocation6], 1024
    $region17: #{tpu_custom_call.1} parent=1 // pred_fallthru
      _
    %v38 = vld [vmem:[#allocation2] sm:$0xff]
    %v39 = vlaneseq
    %v40 = vand.u32 %v39, 127
    %41 = vset.pattern.permute.xlu0 0
    %42 = vperm.xlu0 %41, %v38
    %v43 = vpop.permute.xlu0 %42
    %vm44 = vcmp.eq.s32.totalorder %v40, %v43
    %v45 = vsel %vm44, 1, 0
    %v46 = vcvt.s32.f32 %v45
    %v47 = vadd.s32 %v38, 8
    %48 = vset.pattern.permute.xlu0 1
    %49 = vperm.xlu0 %48, %v47
    %v50 = vpop.permute.xlu0 %49
    %vm51 = vcmp.eq.s32.totalorder %v40, %v50
    %v52 = vsel %vm51, 1, 0
    %v53 = vcvt.s32.f32 %v52
    %v54 = vadd.f32 %v46, %v53
    %v55 = vadd.s32 %v38, 16
    %56 = vset.pattern.permute.xlu0 2
    %57 = vperm.xlu0 %56, %v55
    %v58 = vpop.permute.xlu0 %57
    %vm59 = vcmp.eq.s32.totalorder %v40, %v58
    %v60 = vsel %vm59, 1, 0
    %v61 = vcvt.s32.f32 %v60
    %v62 = vadd.f32 %v54, %v61
    %v63 = vadd.s32 %v38, 24
    %64 = vset.pattern.permute.xlu0 3
    %65 = vperm.xlu0 %64, %v63
    %v66 = vpop.permute.xlu0 %65
    %vm67 = vcmp.eq.s32.totalorder %v40, %v66
    %v68 = vsel %vm67, 1, 0
    %v69 = vcvt.s32.f32 %v68
    %v70 = vadd.f32 %v62, %v69
    %v71 = vadd.s32 %v38, 32
    %72 = vset.pattern.permute.xlu0 4
    %73 = vperm.xlu0 %72, %v71
    %v74 = vpop.permute.xlu0 %73
    %vm75 = vcmp.eq.s32.totalorder %v40, %v74
    %v76 = vsel %vm75, 1, 0
    %v77 = vcvt.s32.f32 %v76
    %v78 = vadd.f32 %v70, %v77
    %v79 = vadd.s32 %v38, 40
    %80 = vset.pattern.permute.xlu0 5
    %81 = vperm.xlu0 %80, %v79
    %v82 = vpop.permute.xlu0 %81
    %vm83 = vcmp.eq.s32.totalorder %v40, %v82
    %v84 = vsel %vm83, 1, 0
    %v85 = vcvt.s32.f32 %v84
    %v86 = vadd.f32 %v78, %v85
    %v87 = vadd.s32 %v38, 48
    %88 = vset.pattern.permute.xlu0 6
    %89 = vperm.xlu0 %88, %v87
    %v90 = vpop.permute.xlu0 %89
    %vm91 = vcmp.eq.s32.totalorder %v40, %v90
    %v92 = vsel %vm91, 1, 0
    %v93 = vcvt.s32.f32 %v92
    %v94 = vadd.f32 %v86, %v93
    %v95 = vadd.s32 %v38, 56
    %96 = vset.pattern.permute.xlu0 7
    %97 = vperm.xlu0 %96, %v95
    %v98 = vpop.permute.xlu0 %97
    %vm99 = vcmp.eq.s32.totalorder %v40, %v98
    %v100 = vsel %vm99, 1, 0
    %v101 = vcvt.s32.f32 %v100
    %v102 = vadd.f32 %v94, %v101
    %v103 = vld [vmem:[#allocation5] sm:$0xff]
    %v104 = vld [vmem:[#allocation5 + $0x8] sm:$0xff]
    %v105 = vld [vmem:[#allocation5 + $0x10] sm:$0xff]
    %v106 = vld [vmem:[#allocation5 + $0x18] sm:$0xff]
    %v107 = vld [vmem:[#allocation5 + $0x20] sm:$0xff]
    %v108 = vld [vmem:[#allocation5 + $0x28] sm:$0xff]
    %v109 = vld [vmem:[#allocation5 + $0x30] sm:$0xff]
    %v110 = vld [vmem:[#allocation5 + $0x38] sm:$0xff]
    %vm111 = vcmask 523264
    %v113 = vsel %vm111, %v102, 0
    %115 = vmatprep.subr.mxu0 0.0
    %116 = vmatpush1.msra.mxu0 %v103
    %117 = vmatprep.subr.mxu0 0.0
    %118 = vmatpush1.msra.mxu0 %v104
    %119 = vmatprep.subr.mxu0 0.0
    %120 = vmatpush1.msra.mxu0 %v105
    %121 = vmatprep.subr.mxu0 0.0
    %122 = vmatpush1.msra.mxu0 %v106
    %123 = vmatprep.subr.mxu0 0.0
    %124 = vmatpush1.msra.mxu0 %v107
    %125 = vmatprep.subr.mxu0 0.0
    %126 = vmatpush1.msra.mxu0 %v108
    %127 = vmatprep.subr.mxu0 0.0
    %128 = vmatpush1.msra.mxu0 %v109
    %129 = vmatprep.subr.mxu0 0.0
    %130 = vmatpush1.msra.mxu0 %v110
    %131 = vmatprep.subr.mxu0 0.0
    %132 = vmatpush1.msra.mxu0 0.0
    %133 = vmatprep.subr.mxu0 0.0
    %134 = vmatpush1.msra.mxu0 0.0
    %135 = vmatprep.subr.mxu0 0.0
    %136 = vmatpush1.msra.mxu0 0.0
    %137 = vmatprep.subr.mxu0 0.0
    %138 = vmatpush1.msra.mxu0 0.0
    %139 = vmatprep.subr.mxu0 0.0
    %140 = vmatpush1.msra.mxu0 0.0
    %141 = vmatprep.subr.mxu0 0.0
    %142 = vmatpush1.msra.mxu0 0.0
    %143 = vmatprep.subr.mxu0 0.0
    %144 = vmatpush1.msra.mxu0 0.0
    %145 = vmatprep.subr.mxu0 0.0
    %146 = vmatpush1.msra.mxu0 0.0
    %147 = vmatprep.subr.mxu0 0.0
    %148 = vmatpush1.msra.mxu0 0.0
    %149 = vmatprep.subr.mxu0 0.0
    %150 = vmatpush1.msra.mxu0 0.0
    %151 = vmatprep.subr.mxu0 0.0
    %152 = vmatpush1.msra.mxu0 0.0
    %153 = vmatprep.subr.mxu0 0.0
    %154 = vmatpush1.msra.mxu0 0.0
    %155 = vmatprep.subr.mxu0 0.0
    %156 = vmatpush1.msra.mxu0 0.0
    %157 = vmatprep.subr.mxu0 0.0
    %158 = vmatpush1.msra.mxu0 0.0
    %159 = vmatprep.subr.mxu0 0.0
    %160 = vmatpush1.msra.mxu0 0.0
    %161 = vmatprep.subr.mxu0 0.0
    %162 = vmatpush1.msra.mxu0 0.0
    %163 = vmatprep.subr.mxu0 0.0
    %164 = vmatpush1.msra.mxu0 0.0
    %165 = vmatprep.subr.mxu0 0.0
    %166 = vmatpush1.msra.mxu0 0.0
    %167 = vmatprep.subr.mxu0 0.0
    %168 = vmatpush1.msra.mxu0 0.0
    %169 = vmatprep.subr.mxu0 0.0
    %170 = vmatpush1.msra.mxu0 0.0
    %171 = vmatprep.subr.mxu0 0.0
    %172 = vmatpush1.msra.mxu0 0.0
    %173 = vmatprep.subr.mxu0 0.0
    %174 = vmatpush1.msra.mxu0 0.0
    %175 = vmatprep.subr.mxu0 0.0
    %176 = vmatpush1.msra.mxu0 0.0
    %177 = vmatprep.subr.mxu0 0.0
    %178 = vmatpush1.msra.mxu0 0.0
    %179 = vmatprep.mubr.f32.mxu0 0.0
    %180 = vmatmul.mubr.f32.gmra.mrb[0].mxu0 %v113
    %v181 = vpop.f32.mrb[0].mxu0
    %v182 = vadd.f32 0.0, %v181
    %v183 = vpop.f32.mrb[0].mxu0
    %184 = vdwg.mxu0
    %185 = vst [vmem:[#allocation7] sm:$0xff] %v182
    // Predicated region
    $region18: #{tpu_custom_call.1} parent=1 // pred_check
      _
    $region19: #{tpu_custom_call.1} parent=1 // pred_check_branch
      %187 = sbr.rel (0) target = $region21
    $region20: #{tpu_custom_call.1} parent=1 // pred_region
      %s189 = ssub.s32 128, 128
      %190 = vsyncadd [#allocation4], %s189
      %s192 = sshll.u32 [#allocation7], 4
      %s193 = int_to_ptr.vmem [resolvable:$true] %s192
      %195 = dma.vmem_to_hbm [thread:$0]  %s193, 128, %s2, [#allocation4]
    $region21: #{tpu_custom_call.1} parent=1 // pred_fallthru
      _
    // Predicated region
    $region22: #{tpu_custom_call.1} parent=1 // pred_check
      _
    $region23: #{tpu_custom_call.1} parent=1 // pred_check_branch
      %197 = sbr.rel (0) target = $region25
    $region24: #{tpu_custom_call.1} parent=1 // pred_region
      %198 = dma.done [#allocation4], 128
    $region25: #{tpu_custom_call.1} parent=1 // pred_fallthru
      _
    %199 = vsyncpa [#allocation3], 1
    %200 = vsyncpa [#allocation6], 1
    %201 = vsyncpa [#allocation4], 1

</llo_original>
